<compile_context>
chip_gen: v7x
topology: tpu7x:2x2x1
jax: 0.10.0
libtpu: 0.0.40
codegen_flags: <defaults>
</compile_context>

<pallas_src>
import functools
import numpy as np

import jax
import jax.numpy as jnp
from jax import lax
from jax.experimental import pallas as pl
from jax.experimental.pallas import tpu as pltpu


def _round_up(n, m):
    return ((n + m - 1) // m) * m


_SQRT_2_OVER_PI = 0.7978845608028654


def _gelu(x):
    # tanh-approximation GELU (PyTorch F.gelu defaults to the exact erf form;
    # the tanh form differs by <1e-3 and lowers cleanly inside Mosaic).
    return 0.5 * x * (1.0 + jnp.tanh(_SQRT_2_OVER_PI * (x + 0.044715 * x * x * x)))


# ---------------------------------------------------------------------------
# Kernel 1: SpectralConv1d channel mixing over the retained Fourier modes.
#   x_ref : (1, 2, Cin, Mpad)   real/imag stacked, modes on the lane axis
#   w_ref : (2, Cin, Cout, Mpad)
#   o_ref : (1, 2, Cout, Mpad)
# out[o, m] = sum_i x[i, m] * w[i, o, m]   (complex, per batch element)
# ---------------------------------------------------------------------------
def _spectral_mix_kernel(x_ref, w_ref, o_ref):
    cin = x_ref.shape[2]
    cout, mpad = o_ref.shape[2], o_ref.shape[3]
    xr = x_ref[0, 0]                          # (Cin, Mpad)
    xi = x_ref[0, 1]
    acc_r = jnp.zeros((cout, mpad), jnp.float32)
    acc_i = jnp.zeros((cout, mpad), jnp.float32)
    # VPU multiply-accumulate over the (small) input-channel axis; every vreg
    # is lane-dense because the padded mode axis sits on the 128 lanes.
    for i in range(cin):
        xr_i = xr[i:i + 1, :]                 # (1, Mpad) -> sublane broadcast
        xi_i = xi[i:i + 1, :]
        wr_i = w_ref[0, i]                    # (Cout, Mpad)
        wi_i = w_ref[1, i]
        acc_r = acc_r + xr_i * wr_i - xi_i * wi_i
        acc_i = acc_i + xr_i * wi_i + xi_i * wr_i
    o_ref[0, 0] = acc_r
    o_ref[0, 1] = acc_i


def pallas_spectral_mix(x_ri, w_ri):
    """x_ri: (B, 2, Cin, Mpad), w_ri: (2, Cin, Cout, Mpad) -> (B, 2, Cout, Mpad)."""
    b, _, cin, mpad = x_ri.shape
    cout = w_ri.shape[2]
    return pl.pallas_call(
        _spectral_mix_kernel,
        out_shape=jax.ShapeDtypeStruct((b, 2, cout, mpad), jnp.float32),
        grid=(b,),
        in_specs=[
            pl.BlockSpec((1, 2, cin, mpad), lambda i: (i, 0, 0, 0)),
            pl.BlockSpec((2, cin, cout, mpad), lambda i: (0, 0, 0, 0)),
        ],
        out_specs=pl.BlockSpec((1, 2, cout, mpad), lambda i: (i, 0, 0, 0)),
        compiler_params=pltpu.CompilerParams(
            dimension_semantics=("parallel",)),
    )(x_ri, w_ri)


# ---------------------------------------------------------------------------
# Kernel 2: fused pointwise channel mixing  y = act(x @ w + b [+ skip]).
# Used for fc0, fc1(+gelu), fc2, and the 1x1 Conv1d branch fused with the
# spectral output add and GELU.
# ---------------------------------------------------------------------------
def _linear_body(x_ref, w_ref, b_ref, s_ref, o_ref, activation):
    tr, cout = o_ref.shape
    cin = x_ref.shape[1]
    acc = jnp.broadcast_to(b_ref[...], (tr, cout))
    if s_ref is not None:
        acc = acc + s_ref[...]
    # Channel counts in this model are <=32, so a VPU multiply-accumulate is
    # used instead of an (under-utilized) MXU matmul.
    for i in range(cin):
        acc = acc + x_ref[:, i:i + 1] * w_ref[i:i + 1, :]
    if activation == "gelu":
        acc = _gelu(acc)
    o_ref[...] = acc


def _linear_kernel(x_ref, w_ref, b_ref, o_ref, *, activation):
    _linear_body(x_ref, w_ref, b_ref, None, o_ref, activation)


def _linear_skip_kernel(x_ref, w_ref, b_ref, s_ref, o_ref, *, activation):
    _linear_body(x_ref, w_ref, b_ref, s_ref, o_ref, activation)


def pallas_linear(x, w, b, skip=None, activation=None):
    """act(x @ w + b [+ skip]) applied over the last axis of x."""
    orig_shape = x.shape
    cin = orig_shape[-1]
    cout = w.shape[1]
    rows = int(np.prod(orig_shape[:-1]))
    x2 = x.reshape(rows, cin).astype(jnp.float32)
    s2 = None if skip is None else skip.reshape(rows, cout).astype(jnp.float32)

    tr = _round_up(rows, 8) if rows <= 128 else 128
    rpad = _round_up(rows, tr)
    if rpad != rows:
        x2 = jnp.pad(x2, ((0, rpad - rows), (0, 0)))
        if s2 is not None:
            s2 = jnp.pad(s2, ((0, rpad - rows), (0, 0)))
    b2 = b.reshape(1, cout).astype(jnp.float32)

    in_specs = [
        pl.BlockSpec((tr, cin), lambda r: (r, 0)),
        pl.BlockSpec((cin, cout), lambda r: (0, 0)),
        pl.BlockSpec((1, cout), lambda r: (0, 0)),
    ]
    args = [x2, w.astype(jnp.float32), b2]
    if s2 is None:
        kernel = functools.partial(_linear_kernel, activation=activation)
    else:
        kernel = functools.partial(_linear_skip_kernel, activation=activation)
        in_specs.append(pl.BlockSpec((tr, cout), lambda r: (r, 0)))
        args.append(s2)

    out = pl.pallas_call(
        kernel,
        out_shape=jax.ShapeDtypeStruct((rpad, cout), jnp.float32),
        grid=(rpad // tr,),
        in_specs=in_specs,
        out_specs=pl.BlockSpec((tr, cout), lambda r: (r, 0)),
        compiler_params=pltpu.CompilerParams(
            dimension_semantics=("parallel",)),
    )(*args)
    return out[:rows].reshape(orig_shape[:-1] + (cout,))


# ---------------------------------------------------------------------------
# Parameter init (distributions follow the PyTorch module).
# ---------------------------------------------------------------------------
def _init_linear(key, fan_in, fan_out):
    k_w, k_b = jax.random.split(key)
    bound = 1.0 / float(np.sqrt(fan_in))
    w = jax.random.uniform(k_w, (fan_in, fan_out), jnp.float32, -bound, bound)
    b = jax.random.uniform(k_b, (fan_out,), jnp.float32, -bound, bound)
    return w, b


def _init_spectral(key, cin, cout, modes, mpad):
    # torch.rand(cin, cout, modes, dtype=cfloat): U[0,1) real/imag, scaled by
    # 1/(cin*cout).  Stored directly in the kernel layout (2, cin, cout, mpad)
    # with the mode axis zero-padded to a lane multiple (re-layout hoisted out
    # of the forward pass).
    k_r, k_i = jax.random.split(key)
    scale = 1.0 / (cin * cout)
    wr = scale * jax.random.uniform(k_r, (cin, cout, modes), jnp.float32)
    wi = scale * jax.random.uniform(k_i, (cin, cout, modes), jnp.float32)
    w = jnp.zeros((2, cin, cout, mpad), jnp.float32)
    return w.at[0, :, :, :modes].set(wr).at[1, :, :, :modes].set(wi)


class FNO1d:
    """JAX/Pallas port of the PyTorch FNO1d (activations kept channel-last)."""

    def __init__(self, num_channels, bc, modes=12, width=10, *, key):
        self.num_channels = num_channels
        self.bc = jnp.asarray(bc, jnp.float32)      # (1, k, 2), k divides width
        self.modes = modes
        self.width = width
        self.mpad = max(128, _round_up(modes, 128))  # lane-dense mode axis
        keys = jax.random.split(key, 11)
        self.fc0_w, self.fc0_b = _init_linear(keys[0], 10 * num_channels + 1, width)
        self.spec_w = [_init_spectral(keys[1 + l], width, width, modes, self.mpad)
                       for l in range(4)]
        wb = [_init_linear(keys[5 + l], width, width) for l in range(4)]
        self.w_w = [w for w, _ in wb]
        self.w_b = [b for _, b in wb]
        self.fc1_w, self.fc1_b = _init_linear(keys[9], width, 32)
        self.fc2_w, self.fc2_b = _init_linear(keys[10], 32, num_channels)

    def _spectral_conv(self, h, w_ri):
        # SpectralConv1d: rfft -> Pallas complex channel mix -> zero-pad irfft.
        batch, s_len, cin = h.shape
        cout = w_ri.shape[2]
        m = self.modes
        x_ft = jnp.fft.rfft(h, axis=1)                           # (B, F, Cin) c64
        xm = jnp.transpose(x_ft[:, :m, :], (0, 2, 1))            # (B, Cin, m)
        x_ri = jnp.stack([jnp.real(xm), jnp.imag(xm)], axis=1)   # (B, 2, Cin, m)
        x_ri = jnp.pad(x_ri.astype(jnp.float32),
                       ((0, 0), (0, 0), (0, 0), (0, self.mpad - m)))
        out_ri = pallas_spectral_mix(x_ri, w_ri)                 # (B, 2, Cout, Mpad)
        om = lax.complex(out_ri[:, 0, :, :m], out_ri[:, 1, :, :m])   # (B, Cout, m)
        out_ft = jnp.zeros((batch, s_len // 2 + 1, cout), jnp.complex64)
        out_ft = out_ft.at[:, :m, :].set(jnp.transpose(om, (0, 2, 1)))
        return jnp.fft.irfft(out_ft, n=s_len, axis=1)            # (B, S, Cout)

    def __call__(self, x, grid):
        # x: (B, S, 10*num_channels), grid: (B, S, 1)
        h = jnp.concatenate([x, grid], axis=-1)
        h = pallas_linear(h, self.fc0_w, self.fc0_b)             # fc0
        batch = h.shape[0]
        mult = self.width // self.bc.shape[1]
        left = jnp.tile(self.bc[0, :, 0], mult)
        right = jnp.tile(self.bc[0, :, 1], mult)
        left = jnp.broadcast_to(left[None, None, :], (batch, 1, self.width))
        right = jnp.broadcast_to(right[None, None, :], (batch, 1, self.width))
        h = jnp.concatenate([left, h, right], axis=1)            # bc padding
        for l in range(4):
            x1 = self._spectral_conv(h, self.spec_w[l])          # K(u)
            act = None if l == 3 else "gelu"
            # W(u) + K(u) (+ GELU) fused in one Pallas call.
            h = pallas_linear(h, self.w_w[l], self.w_b[l], skip=x1, activation=act)
        h = h[:, 1:-1, :]                                        # drop bc points
        h = pallas_linear(h, self.fc1_w, self.fc1_b, activation="gelu")
        h = pallas_linear(h, self.fc2_w, self.fc2_b)
        return h[:, :, None, :]                                  # unsqueeze(-2)


# ---------------------------------------------------------------------------
# Pure-JAX reference (channel-first, mirrors the PyTorch forward line by line).
# ---------------------------------------------------------------------------
def _ref_spectral(h_cf, w_c, modes):
    batch, cin, s_len = h_cf.shape
    cout = w_c.shape[1]
    x_ft = jnp.fft.rfft(h_cf)
    out_m = jnp.einsum('bix,iox->box', x_ft[:, :, :modes], w_c,
                       precision=lax.Precision.HIGHEST)
    out_ft = jnp.zeros((batch, cout, s_len // 2 + 1), jnp.complex64)
    out_ft = out_ft.at[:, :, :modes].set(out_m)
    return jnp.fft.irfft(out_ft, n=s_len)


def _reference_forward(model, x, grid):
    hp = lax.Precision.HIGHEST
    h = jnp.concatenate([x, grid], axis=-1)
    h = jnp.einsum('bsi,io->bso', h, model.fc0_w, precision=hp) + model.fc0_b
    h = jnp.transpose(h, (0, 2, 1))                              # (B, width, S)
    batch = h.shape[0]
    mult = model.width // model.bc.shape[1]
    left = jnp.tile(model.bc[:1, :, :1], (batch, mult, 1))
    right = jnp.tile(model.bc[:1, :, 1:2], (batch, mult, 1))
    h = jnp.concatenate([left, h, right], axis=2)
    for l in range(4):
        w_c = lax.complex(model.spec_w[l][0, :, :, :model.modes],
                          model.spec_w[l][1, :, :, :model.modes])
        x1 = _ref_spectral(h, w_c, model.modes)
        x2 = (jnp.einsum('io,bis->bos', model.w_w[l], h, precision=hp)
              + model.w_b[l][None, :, None])
        h = x1 + x2
        if l < 3:
            h = _gelu(h)
    h = h[:, :, 1:-1]
    h = jnp.transpose(h, (0, 2, 1))
    h = _gelu(jnp.einsum('bsi,io->bso', h, model.fc1_w, precision=hp) + model.fc1_b)
    h = jnp.einsum('bsi,io->bso', h, model.fc2_w, precision=hp) + model.fc2_b
    return h[:, :, None, :]


if __name__ == "__main__":
    key = jax.random.PRNGKey(0)
    k_model, k_x, k_grid, k_bc = jax.random.split(key, 4)

    batch, s_len = 2, 30
    num_channels = 1
    modes, width = 12, 10

    bc = jax.random.normal(k_bc, (1, width, 2), dtype=jnp.float32)
    model = FNO1d(num_channels, bc, modes=modes, width=width, key=k_model)

    x = jax.random.normal(k_x, (batch, s_len, 10 * num_channels), dtype=jnp.float32)
    grid = jax.random.normal(k_grid, (batch, s_len, 1), dtype=jnp.float32)

    y = jax.block_until_ready(model(x, grid))
    y_ref = jax.block_until_ready(_reference_forward(model, x, grid))

    assert y.shape == (batch, s_len, 1, num_channels), y.shape
    max_err = float(jnp.max(jnp.abs(y - y_ref)))
    assert jnp.allclose(y, y_ref, atol=1e-3, rtol=1e-3), f"mismatch: {max_err}"
    print("KERNEL_OK")
</pallas_src>

<mosaic_0001>
module attributes {stable_mosaic.version = 11 : i64} {
  func.func @_linear_kernel(%arg0: i32, %arg1: memref<64x11xf32, #tpu.memory_space<vmem>>, %arg2: memref<11x10xf32, #tpu.memory_space<vmem>>, %arg3: memref<1x10xf32, #tpu.memory_space<vmem>>, %arg4: memref<64x10xf32, #tpu.memory_space<vmem>>) attributes {dimension_semantics = [#tpu.dimension_semantics<parallel>], iteration_bounds = array<i64: 1>, scalar_prefetch = 0 : i64, scratch_operands = 0 : i64, tpu.core_type = #tpu.core_type<tc>, window_params = [{transform_indices = @transform_0, window_bounds = array<i64: 64, 11>}, {pipeline_mode = #tpu.pipeline_mode<synchronous>, transform_indices = @transform_1, window_bounds = array<i64: 11, 10>}, {pipeline_mode = #tpu.pipeline_mode<synchronous>, transform_indices = @transform_2, window_bounds = array<i64: 1, 10>}, {transform_indices = @transform_3, window_bounds = array<i64: 64, 10>}]} {
    %c0 = arith.constant 0 : index
    %c0_0 = arith.constant 0 : index
    %0 = vector.load %arg3[%c0, %c0_0] : memref<1x10xf32, #tpu.memory_space<vmem>>, vector<1x10xf32>
    %1 = vector.shape_cast %0 : vector<1x10xf32> to vector<1x10xf32>
    %2 = vector.broadcast %1 : vector<1x10xf32> to vector<64x10xf32>
    %c0_1 = arith.constant 0 : index
    %c0_2 = arith.constant 0 : index
    %3 = vector.load %arg1[%c0_1, %c0_2] : memref<64x11xf32, #tpu.memory_space<vmem>>, vector<64x1xf32>
    %c0_3 = arith.constant 0 : index
    %c0_4 = arith.constant 0 : index
    %4 = vector.load %arg2[%c0_3, %c0_4] : memref<11x10xf32, #tpu.memory_space<vmem>>, vector<1x10xf32>
    %5 = vector.broadcast %3 : vector<64x1xf32> to vector<64x10xf32>
    %6 = vector.broadcast %4 : vector<1x10xf32> to vector<64x10xf32>
    %7 = arith.mulf %5, %6 : vector<64x10xf32>
    %8 = arith.addf %2, %7 : vector<64x10xf32>
    %c0_5 = arith.constant 0 : index
    %c1 = arith.constant 1 : index
    %9 = vector.load %arg1[%c0_5, %c1] : memref<64x11xf32, #tpu.memory_space<vmem>>, vector<64x1xf32>
    %c1_6 = arith.constant 1 : index
    %c0_7 = arith.constant 0 : index
    %10 = vector.load %arg2[%c1_6, %c0_7] : memref<11x10xf32, #tpu.memory_space<vmem>>, vector<1x10xf32>
    %11 = vector.broadcast %9 : vector<64x1xf32> to vector<64x10xf32>
    %12 = vector.broadcast %10 : vector<1x10xf32> to vector<64x10xf32>
    %13 = arith.mulf %11, %12 : vector<64x10xf32>
    %14 = arith.addf %8, %13 : vector<64x10xf32>
    %c0_8 = arith.constant 0 : index
    %c2 = arith.constant 2 : index
    %15 = vector.load %arg1[%c0_8, %c2] : memref<64x11xf32, #tpu.memory_space<vmem>>, vector<64x1xf32>
    %c2_9 = arith.constant 2 : index
    %c0_10 = arith.constant 0 : index
    %16 = vector.load %arg2[%c2_9, %c0_10] : memref<11x10xf32, #tpu.memory_space<vmem>>, vector<1x10xf32>
    %17 = vector.broadcast %15 : vector<64x1xf32> to vector<64x10xf32>
    %18 = vector.broadcast %16 : vector<1x10xf32> to vector<64x10xf32>
    %19 = arith.mulf %17, %18 : vector<64x10xf32>
    %20 = arith.addf %14, %19 : vector<64x10xf32>
    %c0_11 = arith.constant 0 : index
    %c3 = arith.constant 3 : index
    %21 = vector.load %arg1[%c0_11, %c3] : memref<64x11xf32, #tpu.memory_space<vmem>>, vector<64x1xf32>
    %c3_12 = arith.constant 3 : index
    %c0_13 = arith.constant 0 : index
    %22 = vector.load %arg2[%c3_12, %c0_13] : memref<11x10xf32, #tpu.memory_space<vmem>>, vector<1x10xf32>
    %23 = vector.broadcast %21 : vector<64x1xf32> to vector<64x10xf32>
    %24 = vector.broadcast %22 : vector<1x10xf32> to vector<64x10xf32>
    %25 = arith.mulf %23, %24 : vector<64x10xf32>
    %26 = arith.addf %20, %25 : vector<64x10xf32>
    %c0_14 = arith.constant 0 : index
    %c4 = arith.constant 4 : index
    %27 = vector.load %arg1[%c0_14, %c4] : memref<64x11xf32, #tpu.memory_space<vmem>>, vector<64x1xf32>
    %c4_15 = arith.constant 4 : index
    %c0_16 = arith.constant 0 : index
    %28 = vector.load %arg2[%c4_15, %c0_16] : memref<11x10xf32, #tpu.memory_space<vmem>>, vector<1x10xf32>
    %29 = vector.broadcast %27 : vector<64x1xf32> to vector<64x10xf32>
    %30 = vector.broadcast %28 : vector<1x10xf32> to vector<64x10xf32>
    %31 = arith.mulf %29, %30 : vector<64x10xf32>
    %32 = arith.addf %26, %31 : vector<64x10xf32>
    %c0_17 = arith.constant 0 : index
    %c5 = arith.constant 5 : index
    %33 = vector.load %arg1[%c0_17, %c5] : memref<64x11xf32, #tpu.memory_space<vmem>>, vector<64x1xf32>
    %c5_18 = arith.constant 5 : index
    %c0_19 = arith.constant 0 : index
    %34 = vector.load %arg2[%c5_18, %c0_19] : memref<11x10xf32, #tpu.memory_space<vmem>>, vector<1x10xf32>
    %35 = vector.broadcast %33 : vector<64x1xf32> to vector<64x10xf32>
    %36 = vector.broadcast %34 : vector<1x10xf32> to vector<64x10xf32>
    %37 = arith.mulf %35, %36 : vector<64x10xf32>
    %38 = arith.addf %32, %37 : vector<64x10xf32>
    %c0_20 = arith.constant 0 : index
    %c6 = arith.constant 6 : index
    %39 = vector.load %arg1[%c0_20, %c6] : memref<64x11xf32, #tpu.memory_space<vmem>>, vector<64x1xf32>
    %c6_21 = arith.constant 6 : index
    %c0_22 = arith.constant 0 : index
    %40 = vector.load %arg2[%c6_21, %c0_22] : memref<11x10xf32, #tpu.memory_space<vmem>>, vector<1x10xf32>
    %41 = vector.broadcast %39 : vector<64x1xf32> to vector<64x10xf32>
    %42 = vector.broadcast %40 : vector<1x10xf32> to vector<64x10xf32>
    %43 = arith.mulf %41, %42 : vector<64x10xf32>
    %44 = arith.addf %38, %43 : vector<64x10xf32>
    %c0_23 = arith.constant 0 : index
    %c7 = arith.constant 7 : index
    %45 = vector.load %arg1[%c0_23, %c7] : memref<64x11xf32, #tpu.memory_space<vmem>>, vector<64x1xf32>
    %c7_24 = arith.constant 7 : index
    %c0_25 = arith.constant 0 : index
    %46 = vector.load %arg2[%c7_24, %c0_25] : memref<11x10xf32, #tpu.memory_space<vmem>>, vector<1x10xf32>
    %47 = vector.broadcast %45 : vector<64x1xf32> to vector<64x10xf32>
    %48 = vector.broadcast %46 : vector<1x10xf32> to vector<64x10xf32>
    %49 = arith.mulf %47, %48 : vector<64x10xf32>
    %50 = arith.addf %44, %49 : vector<64x10xf32>
    %c0_26 = arith.constant 0 : index
    %c8 = arith.constant 8 : index
    %51 = vector.load %arg1[%c0_26, %c8] : memref<64x11xf32, #tpu.memory_space<vmem>>, vector<64x1xf32>
    %c8_27 = arith.constant 8 : index
    %c0_28 = arith.constant 0 : index
    %52 = vector.load %arg2[%c8_27, %c0_28] : memref<11x10xf32, #tpu.memory_space<vmem>>, vector<1x10xf32>
    %53 = vector.broadcast %51 : vector<64x1xf32> to vector<64x10xf32>
    %54 = vector.broadcast %52 : vector<1x10xf32> to vector<64x10xf32>
    %55 = arith.mulf %53, %54 : vector<64x10xf32>
    %56 = arith.addf %50, %55 : vector<64x10xf32>
    %c0_29 = arith.constant 0 : index
    %c9 = arith.constant 9 : index
    %57 = vector.load %arg1[%c0_29, %c9] : memref<64x11xf32, #tpu.memory_space<vmem>>, vector<64x1xf32>
    %c9_30 = arith.constant 9 : index
    %c0_31 = arith.constant 0 : index
    %58 = vector.load %arg2[%c9_30, %c0_31] : memref<11x10xf32, #tpu.memory_space<vmem>>, vector<1x10xf32>
    %59 = vector.broadcast %57 : vector<64x1xf32> to vector<64x10xf32>
    %60 = vector.broadcast %58 : vector<1x10xf32> to vector<64x10xf32>
    %61 = arith.mulf %59, %60 : vector<64x10xf32>
    %62 = arith.addf %56, %61 : vector<64x10xf32>
    %c0_32 = arith.constant 0 : index
    %c10 = arith.constant 10 : index
    %63 = vector.load %arg1[%c0_32, %c10] : memref<64x11xf32, #tpu.memory_space<vmem>>, vector<64x1xf32>
    %c10_33 = arith.constant 10 : index
    %c0_34 = arith.constant 0 : index
    %64 = vector.load %arg2[%c10_33, %c0_34] : memref<11x10xf32, #tpu.memory_space<vmem>>, vector<1x10xf32>
    %65 = vector.broadcast %63 : vector<64x1xf32> to vector<64x10xf32>
    %66 = vector.broadcast %64 : vector<1x10xf32> to vector<64x10xf32>
    %67 = arith.mulf %65, %66 : vector<64x10xf32>
    %68 = arith.addf %62, %67 : vector<64x10xf32>
    %c0_35 = arith.constant 0 : index
    %c0_36 = arith.constant 0 : index
    %69 = vector.load %arg4[%c0_35, %c0_36] : memref<64x10xf32, #tpu.memory_space<vmem>>, vector<64x10xf32>
    tpu.vector_store %arg4[%c0_35, %c0_36], %68 {strides = array<i32>} : memref<64x10xf32, #tpu.memory_space<vmem>>, vector<64x10xf32>,
    return
  }
  func.func @transform_0(%arg0: i32) -> (i32, i32) {
    %c0_i32 = arith.constant 0 : i32
    %c0_i32_0 = arith.constant 0 : i32
    return %arg0, %c0_i32 : i32, i32
  }
  func.func @transform_1(%arg0: i32) -> (i32, i32) {
    %c0_i32 = arith.constant 0 : i32
    %c0_i32_0 = arith.constant 0 : i32
    %c0_i32_1 = arith.constant 0 : i32
    return %c0_i32, %c0_i32_0 : i32, i32
  }
  func.func @transform_2(%arg0: i32) -> (i32, i32) {
    %c0_i32 = arith.constant 0 : i32
    %c0_i32_0 = arith.constant 0 : i32
    %c0_i32_1 = arith.constant 0 : i32
    return %c0_i32, %c0_i32_0 : i32, i32
  }
  func.func @transform_3(%arg0: i32) -> (i32, i32) {
    %c0_i32 = arith.constant 0 : i32
    %c0_i32_0 = arith.constant 0 : i32
    return %arg0, %c0_i32 : i32, i32
  }
}

</mosaic_0001>

<llo_original>
// kernel: tpu_custom_call.1
$region0: #{tpu_custom_call.1}
  #allocation0 [shape = 'u32[]', space=smem, size = 0x4, offset = 0x4, fixed_abs, tag = 'smem constant byte address 0x4 - core index']
  #allocation1 [shape = 'u32[144,128]{1,0:T(1,128)}', space=vmem, size = 0x12000, scoped, tag = 'internal scratch']
  %s0 = inlined_call_operand.vmem [shape: f32[64,11], index: 0, kind: input, shape index: {}]
  %s1 = inlined_call_operand.vmem [shape: f32[11,10], index: 1, kind: input, shape index: {}]
  %s2 = inlined_call_operand.vmem [shape: f32[1,10], index: 2, kind: input, shape index: {}]
  %s3 = inlined_call_operand.vmem [shape: f32[64,10], index: 3, kind: output, shape index: {}]
  %s4 = sld [smem:[#allocation0]]
  $region22: #{tpu_custom_call.1} parent=0
    _
  %s6 = ssub.s32 1, %s4
  %s7 = scalar_select 0, %s6, %s4
  // Predicated region
  $region2: #{tpu_custom_call.1} parent=0 // pred_check
    _
  $region3: #{tpu_custom_call.1} parent=0 // pred_check_branch
    %9 = sbr.rel (0) target = $region5
  $region4: #{tpu_custom_call.1} parent=0 // pred_region
    _
  $region5: #{tpu_custom_call.1} parent=0 // pred_fallthru
    _
  // Predicated region
  $region6: #{tpu_custom_call.1} parent=0 // pred_check
    _
  $region7: #{tpu_custom_call.1} parent=0 // pred_check_branch
    %11 = sbr.rel (0) target = $region9
  $region8: #{tpu_custom_call.1} parent=0 // pred_region
    _
  $region9: #{tpu_custom_call.1} parent=0 // pred_fallthru
    _
  // Predicated region
  $region10: #{tpu_custom_call.1} parent=0 // pred_check
    _
  $region11: #{tpu_custom_call.1} parent=0 // pred_check_branch
    %13 = sbr.rel (0) target = $region13
  $region12: #{tpu_custom_call.1} parent=0 // pred_region
    _
  $region13: #{tpu_custom_call.1} parent=0 // pred_fallthru
    _
  %v14 = vld [vmem:[%s2] sm:$0x1]
  %v16 = vlaneseq
  %v17 = vshrl.u32 %v16, 7
  %v18 = vsub.s32 0, %v17
  %v19 = vrot.slane %v14, %v18
  %v21 = vld [vmem:[%s0] sm:$0xff]
  %v22 = vld [vmem:[%s0 + $0x8] sm:$0xff]
  %v23 = vld [vmem:[%s0 + $0x10] sm:$0xff]
  %v24 = vld [vmem:[%s0 + $0x18] sm:$0xff]
  %v25 = vld [vmem:[%s0 + $0x20] sm:$0xff]
  %v26 = vld [vmem:[%s0 + $0x28] sm:$0xff]
  %v27 = vld [vmem:[%s0 + $0x30] sm:$0xff]
  %v28 = vld [vmem:[%s0 + $0x38] sm:$0xff]
  %v29 = vld [vmem:[%s1] sm:$0x1]
  %31 = vset.pattern.permute.xlu0 0
  %32 = vperm.xlu0 %31, %v21
  %v33 = vpop.permute.xlu0 %32
  %36 = vset.pattern.permute.xlu0 0
  %37 = vperm.xlu0 %36, %v22
  %v38 = vpop.permute.xlu0 %37
  %41 = vset.pattern.permute.xlu0 0
  %42 = vperm.xlu0 %41, %v23
  %v43 = vpop.permute.xlu0 %42
  %46 = vset.pattern.permute.xlu0 0
  %47 = vperm.xlu0 %46, %v24
  %v48 = vpop.permute.xlu0 %47
  %51 = vset.pattern.permute.xlu0 0
  %52 = vperm.xlu0 %51, %v25
  %v53 = vpop.permute.xlu0 %52
  %56 = vset.pattern.permute.xlu0 0
  %57 = vperm.xlu0 %56, %v26
  %v58 = vpop.permute.xlu0 %57
  %61 = vset.pattern.permute.xlu0 0
  %62 = vperm.xlu0 %61, %v27
  %v63 = vpop.permute.xlu0 %62
  %66 = vset.pattern.permute.xlu0 0
  %67 = vperm.xlu0 %66, %v28
  %v68 = vpop.permute.xlu0 %67
  %v70 = vlaneseq
  %v71 = vshrl.u32 %v70, 7
  %v72 = vsub.s32 0, %v71
  %v73 = vrot.slane %v29, %v72
  %v74 = vmul.f32 %v33, %v73
  %v75 = vmul.f32 %v38, %v73
  %v76 = vmul.f32 %v43, %v73
  %v77 = vmul.f32 %v48, %v73
  %v78 = vmul.f32 %v53, %v73
  %v79 = vmul.f32 %v58, %v73
  %v80 = vmul.f32 %v63, %v73
  %v81 = vmul.f32 %v68, %v73
  %v82 = vadd.f32 %v19, %v74
  %v83 = vadd.f32 %v19, %v75
  %v84 = vadd.f32 %v19, %v76
  %v85 = vadd.f32 %v19, %v77
  %v86 = vadd.f32 %v19, %v78
  %v87 = vadd.f32 %v19, %v79
  %v88 = vadd.f32 %v19, %v80
  %v89 = vadd.f32 %v19, %v81
  %v90 = vld [vmem:[%s1 + $0x1] sm:$0x1]
  %91 = vset.pattern.permute.xlu0 1
  %92 = vperm.xlu0 %91, %v21
  %v93 = vpop.permute.xlu0 %92
  %95 = vset.pattern.permute.xlu0 1
  %96 = vperm.xlu0 %95, %v22
  %v97 = vpop.permute.xlu0 %96
  %99 = vset.pattern.permute.xlu0 1
  %100 = vperm.xlu0 %99, %v23
  %v101 = vpop.permute.xlu0 %100
  %103 = vset.pattern.permute.xlu0 1
  %104 = vperm.xlu0 %103, %v24
  %v105 = vpop.permute.xlu0 %104
  %107 = vset.pattern.permute.xlu0 1
  %108 = vperm.xlu0 %107, %v25
  %v109 = vpop.permute.xlu0 %108
  %111 = vset.pattern.permute.xlu0 1
  %112 = vperm.xlu0 %111, %v26
  %v113 = vpop.permute.xlu0 %112
  %115 = vset.pattern.permute.xlu0 1
  %116 = vperm.xlu0 %115, %v27
  %v117 = vpop.permute.xlu0 %116
  %119 = vset.pattern.permute.xlu0 1
  %120 = vperm.xlu0 %119, %v28
  %v121 = vpop.permute.xlu0 %120
  %v123 = vlaneseq
  %v124 = vshrl.u32 %v123, 7
  %v125 = vsub.s32 0, %v124
  %v126 = vrot.slane %v90, %v125
  %v127 = vmul.f32 %v93, %v126
  %v128 = vmul.f32 %v97, %v126
  %v129 = vmul.f32 %v101, %v126
  %v130 = vmul.f32 %v105, %v126
  %v131 = vmul.f32 %v109, %v126
  %v132 = vmul.f32 %v113, %v126
  %v133 = vmul.f32 %v117, %v126
  %v134 = vmul.f32 %v121, %v126
  %v135 = vadd.f32 %v82, %v127
  %v136 = vadd.f32 %v83, %v128
  %v137 = vadd.f32 %v84, %v129
  %v138 = vadd.f32 %v85, %v130
  %v139 = vadd.f32 %v86, %v131
  %v140 = vadd.f32 %v87, %v132
  %v141 = vadd.f32 %v88, %v133
  %v142 = vadd.f32 %v89, %v134
  %v143 = vld [vmem:[%s1 + $0x2] sm:$0x1]
  %144 = vset.pattern.permute.xlu0 2
  %145 = vperm.xlu0 %144, %v21
  %v146 = vpop.permute.xlu0 %145
  %148 = vset.pattern.permute.xlu0 2
  %149 = vperm.xlu0 %148, %v22
  %v150 = vpop.permute.xlu0 %149
  %152 = vset.pattern.permute.xlu0 2
  %153 = vperm.xlu0 %152, %v23
  %v154 = vpop.permute.xlu0 %153
  %156 = vset.pattern.permute.xlu0 2
  %157 = vperm.xlu0 %156, %v24
  %v158 = vpop.permute.xlu0 %157
  %160 = vset.pattern.permute.xlu0 2
  %161 = vperm.xlu0 %160, %v25
  %v162 = vpop.permute.xlu0 %161
  %164 = vset.pattern.permute.xlu0 2
  %165 = vperm.xlu0 %164, %v26
  %v166 = vpop.permute.xlu0 %165
  %168 = vset.pattern.permute.xlu0 2
  %169 = vperm.xlu0 %168, %v27
  %v170 = vpop.permute.xlu0 %169
  %172 = vset.pattern.permute.xlu0 2
  %173 = vperm.xlu0 %172, %v28
  %v174 = vpop.permute.xlu0 %173
  %v176 = vlaneseq
  %v177 = vshrl.u32 %v176, 7
  %v178 = vsub.s32 0, %v177
  %v179 = vrot.slane %v143, %v178
  %v180 = vmul.f32 %v146, %v179
  %v181 = vmul.f32 %v150, %v179
  %v182 = vmul.f32 %v154, %v179
  %v183 = vmul.f32 %v158, %v179
  %v184 = vmul.f32 %v162, %v179
  %v185 = vmul.f32 %v166, %v179
  %v186 = vmul.f32 %v170, %v179
  %v187 = vmul.f32 %v174, %v179
  %v188 = vadd.f32 %v135, %v180
  %v189 = vadd.f32 %v136, %v181
  %v190 = vadd.f32 %v137, %v182
  %v191 = vadd.f32 %v138, %v183
  %v192 = vadd.f32 %v139, %v184
  %v193 = vadd.f32 %v140, %v185
  %v194 = vadd.f32 %v141, %v186
  %v195 = vadd.f32 %v142, %v187
  %v196 = vld [vmem:[%s1 + $0x3] sm:$0x1]
  %197 = vset.pattern.permute.xlu0 3
  %198 = vperm.xlu0 %197, %v21
  %v199 = vpop.permute.xlu0 %198
  %201 = vset.pattern.permute.xlu0 3
  %202 = vperm.xlu0 %201, %v22
  %v203 = vpop.permute.xlu0 %202
  %205 = vset.pattern.permute.xlu0 3
  %206 = vperm.xlu0 %205, %v23
  %v207 = vpop.permute.xlu0 %206
  %209 = vset.pattern.permute.xlu0 3
  %210 = vperm.xlu0 %209, %v24
  %v211 = vpop.permute.xlu0 %210
  %213 = vset.pattern.permute.xlu0 3
  %214 = vperm.xlu0 %213, %v25
  %v215 = vpop.permute.xlu0 %214
  %217 = vset.pattern.permute.xlu0 3
  %218 = vperm.xlu0 %217, %v26
  %v219 = vpop.permute.xlu0 %218
  %221 = vset.pattern.permute.xlu0 3
  %222 = vperm.xlu0 %221, %v27
  %v223 = vpop.permute.xlu0 %222
  %225 = vset.pattern.permute.xlu0 3
  %226 = vperm.xlu0 %225, %v28
  %v227 = vpop.permute.xlu0 %226
  %v229 = vlaneseq
  %v230 = vshrl.u32 %v229, 7
  %v231 = vsub.s32 0, %v230
  %v232 = vrot.slane %v196, %v231
  %v233 = vmul.f32 %v199, %v232
  %v234 = vmul.f32 %v203, %v232
  %v235 = vmul.f32 %v207, %v232
  %v236 = vmul.f32 %v211, %v232
  %v237 = vmul.f32 %v215, %v232
  %v238 = vmul.f32 %v219, %v232
  %v239 = vmul.f32 %v223, %v232
  %v240 = vmul.f32 %v227, %v232
  %v241 = vadd.f32 %v188, %v233
  %v242 = vadd.f32 %v189, %v234
  %v243 = vadd.f32 %v190, %v235
  %v244 = vadd.f32 %v191, %v236
  %v245 = vadd.f32 %v192, %v237
  %v246 = vadd.f32 %v193, %v238
  %v247 = vadd.f32 %v194, %v239
  %v248 = vadd.f32 %v195, %v240
  %v249 = vld [vmem:[%s1 + $0x4] sm:$0x1]
  %250 = vset.pattern.permute.xlu0 4
  %251 = vperm.xlu0 %250, %v21
  %v252 = vpop.permute.xlu0 %251
  %254 = vset.pattern.permute.xlu0 4
  %255 = vperm.xlu0 %254, %v22
  %v256 = vpop.permute.xlu0 %255
  %258 = vset.pattern.permute.xlu0 4
  %259 = vperm.xlu0 %258, %v23
  %v260 = vpop.permute.xlu0 %259
  %262 = vset.pattern.permute.xlu0 4
  %263 = vperm.xlu0 %262, %v24
  %v264 = vpop.permute.xlu0 %263
  %266 = vset.pattern.permute.xlu0 4
  %267 = vperm.xlu0 %266, %v25
  %v268 = vpop.permute.xlu0 %267
  %270 = vset.pattern.permute.xlu0 4
  %271 = vperm.xlu0 %270, %v26
  %v272 = vpop.permute.xlu0 %271
  %274 = vset.pattern.permute.xlu0 4
  %275 = vperm.xlu0 %274, %v27
  %v276 = vpop.permute.xlu0 %275
  %278 = vset.pattern.permute.xlu0 4
  %279 = vperm.xlu0 %278, %v28
  %v280 = vpop.permute.xlu0 %279
  %v282 = vlaneseq
  %v283 = vshrl.u32 %v282, 7
  %v284 = vsub.s32 0, %v283
  %v285 = vrot.slane %v249, %v284
  %v286 = vmul.f32 %v252, %v285
  %v287 = vmul.f32 %v256, %v285
  %v288 = vmul.f32 %v260, %v285
  %v289 = vmul.f32 %v264, %v285
  %v290 = vmul.f32 %v268, %v285
  %v291 = vmul.f32 %v272, %v285
  %v292 = vmul.f32 %v276, %v285
  %v293 = vmul.f32 %v280, %v285
  %v294 = vadd.f32 %v241, %v286
  %v295 = vadd.f32 %v242, %v287
  %v296 = vadd.f32 %v243, %v288
  %v297 = vadd.f32 %v244, %v289
  %v298 = vadd.f32 %v245, %v290
  %v299 = vadd.f32 %v246, %v291
  %v300 = vadd.f32 %v247, %v292
  %v301 = vadd.f32 %v248, %v293
  %v302 = vld [vmem:[%s1 + $0x5] sm:$0x1]
  %303 = vset.pattern.permute.xlu0 5
  %304 = vperm.xlu0 %303, %v21
  %v305 = vpop.permute.xlu0 %304
  %307 = vset.pattern.permute.xlu0 5
  %308 = vperm.xlu0 %307, %v22
  %v309 = vpop.permute.xlu0 %308
  %311 = vset.pattern.permute.xlu0 5
  %312 = vperm.xlu0 %311, %v23
  %v313 = vpop.permute.xlu0 %312
  %315 = vset.pattern.permute.xlu0 5
  %316 = vperm.xlu0 %315, %v24
  %v317 = vpop.permute.xlu0 %316
  %319 = vset.pattern.permute.xlu0 5
  %320 = vperm.xlu0 %319, %v25
  %v321 = vpop.permute.xlu0 %320
  %323 = vset.pattern.permute.xlu0 5
  %324 = vperm.xlu0 %323, %v26
  %v325 = vpop.permute.xlu0 %324
  %327 = vset.pattern.permute.xlu0 5
  %328 = vperm.xlu0 %327, %v27
  %v329 = vpop.permute.xlu0 %328
  %331 = vset.pattern.permute.xlu0 5
  %332 = vperm.xlu0 %331, %v28
  %v333 = vpop.permute.xlu0 %332
  %v335 = vlaneseq
  %v336 = vshrl.u32 %v335, 7
  %v337 = vsub.s32 0, %v336
  %v338 = vrot.slane %v302, %v337
  %v339 = vmul.f32 %v305, %v338
  %v340 = vmul.f32 %v309, %v338
  %v341 = vmul.f32 %v313, %v338
  %v342 = vmul.f32 %v317, %v338
  %v343 = vmul.f32 %v321, %v338
  %v344 = vmul.f32 %v325, %v338
  %v345 = vmul.f32 %v329, %v338
  %v346 = vmul.f32 %v333, %v338
  %v347 = vadd.f32 %v294, %v339
  %v348 = vadd.f32 %v295, %v340
  %v349 = vadd.f32 %v296, %v341
  %v350 = vadd.f32 %v297, %v342
  %v351 = vadd.f32 %v298, %v343
  %v352 = vadd.f32 %v299, %v344
  %v353 = vadd.f32 %v300, %v345
  %v354 = vadd.f32 %v301, %v346
  %v355 = vld [vmem:[%s1 + $0x6] sm:$0x1]
  %356 = vset.pattern.permute.xlu0 6
  %357 = vperm.xlu0 %356, %v21
  %v358 = vpop.permute.xlu0 %357
  %360 = vset.pattern.permute.xlu0 6
  %361 = vperm.xlu0 %360, %v22
  %v362 = vpop.permute.xlu0 %361
  %364 = vset.pattern.permute.xlu0 6
  %365 = vperm.xlu0 %364, %v23
  %v366 = vpop.permute.xlu0 %365
  %368 = vset.pattern.permute.xlu0 6
  %369 = vperm.xlu0 %368, %v24
  %v370 = vpop.permute.xlu0 %369
  %372 = vset.pattern.permute.xlu0 6
  %373 = vperm.xlu0 %372, %v25
  %v374 = vpop.permute.xlu0 %373
  %376 = vset.pattern.permute.xlu0 6
  %377 = vperm.xlu0 %376, %v26
  %v378 = vpop.permute.xlu0 %377
  %380 = vset.pattern.permute.xlu0 6
  %381 = vperm.xlu0 %380, %v27
  %v382 = vpop.permute.xlu0 %381
  %384 = vset.pattern.permute.xlu0 6
  %385 = vperm.xlu0 %384, %v28
  %v386 = vpop.permute.xlu0 %385
  %v388 = vlaneseq
  %v389 = vshrl.u32 %v388, 7
  %v390 = vsub.s32 0, %v389
  %v391 = vrot.slane %v355, %v390
  %v392 = vmul.f32 %v358, %v391
  %v393 = vmul.f32 %v362, %v391
  %v394 = vmul.f32 %v366, %v391
  %v395 = vmul.f32 %v370, %v391
  %v396 = vmul.f32 %v374, %v391
  %v397 = vmul.f32 %v378, %v391
  %v398 = vmul.f32 %v382, %v391
  %v399 = vmul.f32 %v386, %v391
  %v400 = vadd.f32 %v347, %v392
  %v401 = vadd.f32 %v348, %v393
  %v402 = vadd.f32 %v349, %v394
  %v403 = vadd.f32 %v350, %v395
  %v404 = vadd.f32 %v351, %v396
  %v405 = vadd.f32 %v352, %v397
  %v406 = vadd.f32 %v353, %v398
  %v407 = vadd.f32 %v354, %v399
  %v408 = vld [vmem:[%s1 + $0x7] sm:$0x1]
  %409 = vset.pattern.permute.xlu0 7
  %410 = vperm.xlu0 %409, %v21
  %v411 = vpop.permute.xlu0 %410
  %413 = vset.pattern.permute.xlu0 7
  %414 = vperm.xlu0 %413, %v22
  %v415 = vpop.permute.xlu0 %414
  %417 = vset.pattern.permute.xlu0 7
  %418 = vperm.xlu0 %417, %v23
  %v419 = vpop.permute.xlu0 %418
  %421 = vset.pattern.permute.xlu0 7
  %422 = vperm.xlu0 %421, %v24
  %v423 = vpop.permute.xlu0 %422
  %425 = vset.pattern.permute.xlu0 7
  %426 = vperm.xlu0 %425, %v25
  %v427 = vpop.permute.xlu0 %426
  %429 = vset.pattern.permute.xlu0 7
  %430 = vperm.xlu0 %429, %v26
  %v431 = vpop.permute.xlu0 %430
  %433 = vset.pattern.permute.xlu0 7
  %434 = vperm.xlu0 %433, %v27
  %v435 = vpop.permute.xlu0 %434
  %437 = vset.pattern.permute.xlu0 7
  %438 = vperm.xlu0 %437, %v28
  %v439 = vpop.permute.xlu0 %438
  %v441 = vlaneseq
  %v442 = vshrl.u32 %v441, 7
  %v443 = vsub.s32 0, %v442
  %v444 = vrot.slane %v408, %v443
  %v445 = vmul.f32 %v411, %v444
  %v446 = vmul.f32 %v415, %v444
  %v447 = vmul.f32 %v419, %v444
  %v448 = vmul.f32 %v423, %v444
  %v449 = vmul.f32 %v427, %v444
  %v450 = vmul.f32 %v431, %v444
  %v451 = vmul.f32 %v435, %v444
  %v452 = vmul.f32 %v439, %v444
  %v453 = vadd.f32 %v400, %v445
  %v454 = vadd.f32 %v401, %v446
  %v455 = vadd.f32 %v402, %v447
  %v456 = vadd.f32 %v403, %v448
  %v457 = vadd.f32 %v404, %v449
  %v458 = vadd.f32 %v405, %v450
  %v459 = vadd.f32 %v406, %v451
  %v460 = vadd.f32 %v407, %v452
  %v461 = vld [vmem:[%s1 + $0x8] sm:$0x1]
  %462 = vset.pattern.permute.xlu0 8
  %463 = vperm.xlu0 %462, %v21
  %v464 = vpop.permute.xlu0 %463
  %466 = vset.pattern.permute.xlu0 8
  %467 = vperm.xlu0 %466, %v22
  %v468 = vpop.permute.xlu0 %467
  %470 = vset.pattern.permute.xlu0 8
  %471 = vperm.xlu0 %470, %v23
  %v472 = vpop.permute.xlu0 %471
  %474 = vset.pattern.permute.xlu0 8
  %475 = vperm.xlu0 %474, %v24
  %v476 = vpop.permute.xlu0 %475
  %478 = vset.pattern.permute.xlu0 8
  %479 = vperm.xlu0 %478, %v25
  %v480 = vpop.permute.xlu0 %479
  %482 = vset.pattern.permute.xlu0 8
  %483 = vperm.xlu0 %482, %v26
  %v484 = vpop.permute.xlu0 %483
  %486 = vset.pattern.permute.xlu0 8
  %487 = vperm.xlu0 %486, %v27
  %v488 = vpop.permute.xlu0 %487
  %490 = vset.pattern.permute.xlu0 8
  %491 = vperm.xlu0 %490, %v28
  %v492 = vpop.permute.xlu0 %491
  %v494 = vlaneseq
  %v495 = vshrl.u32 %v494, 7
  %v496 = vsub.s32 0, %v495
  %v497 = vrot.slane %v461, %v496
  %v498 = vmul.f32 %v464, %v497
  %v499 = vmul.f32 %v468, %v497
  %v500 = vmul.f32 %v472, %v497
  %v501 = vmul.f32 %v476, %v497
  %v502 = vmul.f32 %v480, %v497
  %v503 = vmul.f32 %v484, %v497
  %v504 = vmul.f32 %v488, %v497
  %v505 = vmul.f32 %v492, %v497
  %v506 = vadd.f32 %v453, %v498
  %v507 = vadd.f32 %v454, %v499
  %v508 = vadd.f32 %v455, %v500
  %v509 = vadd.f32 %v456, %v501
  %v510 = vadd.f32 %v457, %v502
  %v511 = vadd.f32 %v458, %v503
  %v512 = vadd.f32 %v459, %v504
  %v513 = vadd.f32 %v460, %v505
  %v514 = vld [vmem:[%s1 + $0x9] sm:$0x1]
  %515 = vset.pattern.permute.xlu0 9
  %516 = vperm.xlu0 %515, %v21
  %v517 = vpop.permute.xlu0 %516
  %519 = vset.pattern.permute.xlu0 9
  %520 = vperm.xlu0 %519, %v22
  %v521 = vpop.permute.xlu0 %520
  %523 = vset.pattern.permute.xlu0 9
  %524 = vperm.xlu0 %523, %v23
  %v525 = vpop.permute.xlu0 %524
  %527 = vset.pattern.permute.xlu0 9
  %528 = vperm.xlu0 %527, %v24
  %v529 = vpop.permute.xlu0 %528
  %531 = vset.pattern.permute.xlu0 9
  %532 = vperm.xlu0 %531, %v25
  %v533 = vpop.permute.xlu0 %532
  %535 = vset.pattern.permute.xlu0 9
  %536 = vperm.xlu0 %535, %v26
  %v537 = vpop.permute.xlu0 %536
  %539 = vset.pattern.permute.xlu0 9
  %540 = vperm.xlu0 %539, %v27
  %v541 = vpop.permute.xlu0 %540
  %543 = vset.pattern.permute.xlu0 9
  %544 = vperm.xlu0 %543, %v28
  %v545 = vpop.permute.xlu0 %544
  %v547 = vlaneseq
  %v548 = vshrl.u32 %v547, 7
  %v549 = vsub.s32 0, %v548
  %v550 = vrot.slane %v514, %v549
  %v551 = vmul.f32 %v517, %v550
  %v552 = vmul.f32 %v521, %v550
  %v553 = vmul.f32 %v525, %v550
  %v554 = vmul.f32 %v529, %v550
  %v555 = vmul.f32 %v533, %v550
  %v556 = vmul.f32 %v537, %v550
  %v557 = vmul.f32 %v541, %v550
  %v558 = vmul.f32 %v545, %v550
  %v559 = vadd.f32 %v506, %v551
  %v560 = vadd.f32 %v507, %v552
  %v561 = vadd.f32 %v508, %v553
  %v562 = vadd.f32 %v509, %v554
  %v563 = vadd.f32 %v510, %v555
  %v564 = vadd.f32 %v511, %v556
  %v565 = vadd.f32 %v512, %v557
  %v566 = vadd.f32 %v513, %v558
  %v567 = vld [vmem:[%s1 + $0xa] sm:$0x1]
  %568 = vset.pattern.permute.xlu0 10
  %569 = vperm.xlu0 %568, %v21
  %v570 = vpop.permute.xlu0 %569
  %572 = vset.pattern.permute.xlu0 10
  %573 = vperm.xlu0 %572, %v22
  %v574 = vpop.permute.xlu0 %573
  %576 = vset.pattern.permute.xlu0 10
  %577 = vperm.xlu0 %576, %v23
  %v578 = vpop.permute.xlu0 %577
  %580 = vset.pattern.permute.xlu0 10
  %581 = vperm.xlu0 %580, %v24
  %v582 = vpop.permute.xlu0 %581
  %584 = vset.pattern.permute.xlu0 10
  %585 = vperm.xlu0 %584, %v25
  %v586 = vpop.permute.xlu0 %585
  %588 = vset.pattern.permute.xlu0 10
  %589 = vperm.xlu0 %588, %v26
  %v590 = vpop.permute.xlu0 %589
  %592 = vset.pattern.permute.xlu0 10
  %593 = vperm.xlu0 %592, %v27
  %v594 = vpop.permute.xlu0 %593
  %596 = vset.pattern.permute.xlu0 10
  %597 = vperm.xlu0 %596, %v28
  %v598 = vpop.permute.xlu0 %597
  %v600 = vlaneseq
  %v601 = vshrl.u32 %v600, 7
  %v602 = vsub.s32 0, %v601
  %v603 = vrot.slane %v567, %v602
  %v604 = vmul.f32 %v570, %v603
  %v605 = vmul.f32 %v574, %v603
  %v606 = vmul.f32 %v578, %v603
  %v607 = vmul.f32 %v582, %v603
  %v608 = vmul.f32 %v586, %v603
  %v609 = vmul.f32 %v590, %v603
  %v610 = vmul.f32 %v594, %v603
  %v611 = vmul.f32 %v598, %v603
  %v612 = vadd.f32 %v559, %v604
  %v613 = vadd.f32 %v560, %v605
  %v614 = vadd.f32 %v561, %v606
  %v615 = vadd.f32 %v562, %v607
  %v616 = vadd.f32 %v563, %v608
  %v617 = vadd.f32 %v564, %v609
  %v618 = vadd.f32 %v565, %v610
  %v619 = vadd.f32 %v566, %v611
  %vm620 = vcmask 80896
  %621 = vst.msk [vmem:[%s3] sm:$0xff] %vm620, %v612
  %622 = vst.msk [vmem:[%s3 + $0x8] sm:$0xff] %vm620, %v613
  %623 = vst.msk [vmem:[%s3 + $0x10] sm:$0xff] %vm620, %v614
  %624 = vst.msk [vmem:[%s3 + $0x18] sm:$0xff] %vm620, %v615
  %625 = vst.msk [vmem:[%s3 + $0x20] sm:$0xff] %vm620, %v616
  %626 = vst.msk [vmem:[%s3 + $0x28] sm:$0xff] %vm620, %v617
  %627 = vst.msk [vmem:[%s3 + $0x30] sm:$0xff] %vm620, %v618
  %628 = vst.msk [vmem:[%s3 + $0x38] sm:$0xff] %vm620, %v619
  // Predicated region
  $region14: #{tpu_custom_call.1} parent=0 // pred_check
    _
  $region15: #{tpu_custom_call.1} parent=0 // pred_check_branch
    %630 = sbr.rel (0) target = $region17
  $region16: #{tpu_custom_call.1} parent=0 // pred_region
    _
  $region17: #{tpu_custom_call.1} parent=0 // pred_fallthru
    _
  // Predicated region
  $region18: #{tpu_custom_call.1} parent=0 // pred_check
    _
  $region19: #{tpu_custom_call.1} parent=0 // pred_check_branch
    %632 = sbr.rel (0) target = $region21
  $region20: #{tpu_custom_call.1} parent=0 // pred_region
    _
  $region21: #{tpu_custom_call.1} parent=0 // pred_fallthru
    _

</llo_original>
